<compile_context>
chip_gen: v7x
topology: tpu7x:2x2x1
jax: 0.10.0
libtpu: 0.0.40
codegen_flags: <defaults>
</compile_context>

<pallas_src>
import math
from functools import partial

import jax
import jax.numpy as jnp
from jax import lax
from jax.experimental import pallas as pl
from jax.experimental.pallas import tpu as pltpu


TM = 256                 # adj node-row tile (sweep 256-512 on v5e/v6e, 128-256 on v7x)
NUM_SPLITS = 2           # outer "parallel" grid axis -> both TensorCores on v7x
ADJ_PIPELINE_DEPTH = 2   # sweep 3 if adj DMA-issue jitter is exposed (skip on tight-VMEM v7x)


def _round_up(v, m):
    return -(-v // m) * m


def prepare_adjacency(adj):
    """Pad adj to the kernel's tile-aligned shape and cast to bf16.

    The dense adjacency is the invariant of the graph and the dominant HBM
    traffic of the kernel: prepare it ONCE and reuse it across forward calls.
    """
    n = adj.shape[0]
    n_pad = _round_up(max(n, TM * NUM_SPLITS), TM * NUM_SPLITS)
    return jnp.pad(adj, ((0, n_pad - n), (0, n_pad - n))).astype(jnp.bfloat16)


def _gnn_pool_kernel(support_ref, adj_ref, bg_ref, scopes_ref, pooled_ref):
    c = pl.program_id(0)     # core-split index ("parallel")
    i = pl.program_id(1)     # node-row tile within the split ("arbitrary")

    @pl.when(i == 0)
    def _init():
        pooled_ref[...] = jnp.zeros_like(pooled_ref)

    tm = adj_ref.shape[0]
    b_pad = pooled_ref.shape[0]

    # GraphConv row tile: h = relu(adj_tile @ support + b_gcn), f32 accumulate.
    h = jnp.dot(adj_ref[...], support_ref[...], preferred_element_type=jnp.float32)
    h = jnp.maximum(h + bg_ref[...], 0.0)
    # TODO(synk): dropout is identity here (eval mode / deterministic kernel).

    # Segment-sum mask (B_pad, TM) for this node-row tile, built from scope scalars
    # in-kernel (no (B, N) scope matrix is ever DMA'd from HBM).
    row0 = (c * pl.num_programs(1) + i) * tm
    col = row0 + lax.broadcasted_iota(jnp.int32, (b_pad, tm), 1)
    starts = scopes_ref[:, 0:1]
    ends = scopes_ref[:, 1:2]
    seg = jnp.logical_and(col >= starts, col < ends).astype(jnp.float32)

    # Exact f32 segment-sum accumulated in the resident output block.
    pooled_ref[...] += jnp.dot(seg, h, preferred_element_type=jnp.float32)


@partial(jax.jit, static_argnames=("n_nodes",))
def gnn_classifier_forward(x, adj_p, starts, lengths, params, *, n_nodes):
    """x: (Nx, H) f32; adj_p: prepared bf16 padded adjacency (prepare_adjacency);
    starts/lengths: (B,) int32 device arrays; n_nodes: original node count."""
    wg, bg, wm, bm = params

    # "Dummy first node" convention from the PyTorch module (static shape check).
    if x.shape[0] - n_nodes == 1:
        x = x[1:]
        # TODO(synk): the convention implies scopes start at >= 1; clamp guards st == 0.
        starts = jnp.maximum(starts.astype(jnp.int32) - 1, 0)

    n, nhid = x.shape
    n_pad = adj_p.shape[0]
    b = starts.shape[0]
    nclass = wm.shape[1]

    assert adj_p.dtype == jnp.bfloat16, "pass adj through prepare_adjacency()"
    assert n_pad % (TM * NUM_SPLITS) == 0 and n <= n_pad

    h_pad = _round_up(nhid, 128)
    b_pad = _round_up(b, 8)

    # support = x @ W_gcn, hoisted out of the grid (resident bf16 kernel input).
    x_p = jnp.pad(x, ((0, n_pad - n), (0, h_pad - nhid))).astype(jnp.bfloat16)
    wg_p = jnp.pad(wg, ((0, h_pad - nhid), (0, h_pad - nhid))).astype(jnp.bfloat16)
    support = jnp.dot(x_p, wg_p, preferred_element_type=jnp.float32).astype(jnp.bfloat16)

    bg_p = jnp.pad(bg, (0, h_pad - nhid)).reshape(1, h_pad).astype(jnp.float32)

    # Merged scope table [start, end); padded batch rows are empty (0, 0).
    starts_i = starts.astype(jnp.int32)
    ends_i = starts_i + lengths.astype(jnp.int32)
    scopes_p = jnp.pad(jnp.stack([starts_i, ends_i], axis=1), ((0, b_pad - b), (0, 0)))

    tiles_per_split = n_pad // (TM * NUM_SPLITS)

    # Explicit scoped-VMEM budget from the real buffer sizes (+25% headroom).
    vmem_need = (ADJ_PIPELINE_DEPTH * TM * n_pad * 2      # streamed adj tiles (bf16)
                 + n_pad * h_pad * 2                      # resident support (bf16)
                 + 2 * b_pad * h_pad * 4                  # pooled output block
                 + h_pad * 4 + 8 * 128 * 4)               # bias + scope tiles
    vmem_limit = min(max(int(vmem_need * 1.25) + (2 << 20), 24 << 20), 64 << 20)

    flops = 2 * (n_pad * n_pad * h_pad + b_pad * n_pad * h_pad)
    bytes_accessed = ((adj_p.size + support.size) * 2
                      + NUM_SPLITS * b_pad * h_pad * 4
                      + bg_p.size * 4 + scopes_p.size * 4)

    def resident(shape):
        # Constant index map -> fetched once; single-buffer to halve its VMEM cost.
        return pl.BlockSpec(shape, lambda c, i: (0, 0), pipeline_mode=pl.Buffered(1))

    partials = pl.pallas_call(
        _gnn_pool_kernel,
        out_shape=jax.ShapeDtypeStruct((NUM_SPLITS, b_pad, h_pad), jnp.float32),
        grid_spec=pltpu.PrefetchScalarGridSpec(
            num_scalar_prefetch=0,
            grid=(NUM_SPLITS, tiles_per_split),
            in_specs=[
                resident((n_pad, h_pad)),                               # support (resident)
                pl.BlockSpec((TM, n_pad),
                             lambda c, i: (c * tiles_per_split + i, 0),
                             pipeline_mode=pl.Buffered(ADJ_PIPELINE_DEPTH)),  # adj stream
                resident((1, h_pad)),                                   # b_gcn
                resident((b_pad, 2)),                                   # scope table
            ],
            out_specs=pl.BlockSpec((None, b_pad, h_pad), lambda c, i: (c, 0, 0)),
        ),
        compiler_params=pltpu.CompilerParams(
            dimension_semantics=("parallel", "arbitrary"),
            vmem_limit_bytes=vmem_limit),
        cost_estimate=pl.CostEstimate(flops=flops, transcendentals=0,
                                      bytes_accessed=bytes_accessed),
    )(support, adj_p, bg_p, scopes_p)

    # Reduce per-core partial pools; tiny classifier stays in f32 (no extra rounding).
    pooled = partials.sum(axis=0)[:b, :nhid]
    return pooled @ wm + bm


def reference_forward(x, adj, scopes, params):
    """Pure-JAX f32 reference matching the PyTorch semantics (eval mode)."""
    if x.shape[0] - adj.shape[0] == 1:
        x = x[1:]
        scopes = [(st - 1, le) for st, le in scopes]
    wg, bg, wm, bm = params
    h = jnp.maximum(adj @ (x @ wg) + bg, 0.0)
    pooled = jnp.stack([h[st:st + le].sum(axis=0) for st, le in scopes])
    return pooled @ wm + bm


if __name__ == "__main__":
    key = jax.random.PRNGKey(0)
    N, NHID, NCLASS = 200, 32, 8
    scopes = [(0, 70), (70, 60), (130, 70)]   # three "molecules"
    B = len(scopes)
    # Scopes must never reference node indices >= N (padded adj rows carry relu(b_gcn)).
    assert all(0 <= st and st + le <= N for st, le in scopes)

    k_x, k_adj, k_wg, k_bg, k_wm, k_bm = jax.random.split(key, 6)

    # Node features and a dense symmetric row-normalized adjacency.
    x = jax.random.normal(k_x, (N, NHID), dtype=jnp.float32)
    a = jax.random.uniform(k_adj, (N, N), dtype=jnp.float32)
    a = (a + a.T) * 0.5 + jnp.eye(N, dtype=jnp.float32)
    adj = a / a.sum(axis=1, keepdims=True)

    # GraphConv params (torch: uniform(-stdv, stdv), stdv = 1/sqrt(out_features)).
    stdv = 1.0 / math.sqrt(NHID)
    wg = jax.random.uniform(k_wg, (NHID, NHID), minval=-stdv, maxval=stdv, dtype=jnp.float32)
    bg = jax.random.uniform(k_bg, (NHID,), minval=-stdv, maxval=stdv, dtype=jnp.float32)

    # mlp: weight ~ N(0, 0.05), bias ~ U(-1/sqrt(nhid), 1/sqrt(nhid)); stored (nhid, nclass).
    wm = 0.05 * jax.random.normal(k_wm, (NHID, NCLASS), dtype=jnp.float32)
    bm = jax.random.uniform(k_bm, (NCLASS,), minval=-stdv, maxval=stdv, dtype=jnp.float32)
    params = (wg, bg, wm, bm)

    starts = jnp.asarray([s for s, _ in scopes], dtype=jnp.int32)
    lengths = jnp.asarray([l for _, l in scopes], dtype=jnp.int32)

    adj_p = prepare_adjacency(adj)   # once per graph; reused across forward calls
    out = gnn_classifier_forward(x, adj_p, starts, lengths, params, n_nodes=N)
    out = jax.block_until_ready(out)

    ref = reference_forward(x, adj, scopes, params)
    assert out.shape == (B, NCLASS)
    # bf16 MXU operands with f32 accumulation + f32 classifier: loosened tolerance.
    assert jnp.allclose(out, ref, atol=5e-2, rtol=5e-2), (
        "mismatch vs reference, max abs diff "
        f"{float(jnp.max(jnp.abs(out - ref)))}")

    print("KERNEL_OK")
</pallas_src>

<mosaic_0001>
module attributes {stable_mosaic.version = 11 : i64} {
  func.func @_gnn_pool_kernel(%arg0: i32, %arg1: i32, %arg2: memref<512x128xbf16, #tpu.memory_space<vmem>>, %arg3: memref<256x512xbf16, #tpu.memory_space<vmem>>, %arg4: memref<1x128xf32, #tpu.memory_space<vmem>>, %arg5: memref<8x2xi32, #tpu.memory_space<vmem>>, %arg6: memref<1x8x128xf32, #tpu.memory_space<vmem>>) attributes {dimension_semantics = [#tpu.dimension_semantics<parallel>, #tpu.dimension_semantics<arbitrary>], iteration_bounds = array<i64: 2, 1>, scalar_prefetch = 0 : i64, scratch_operands = 0 : i64, tpu.core_type = #tpu.core_type<tc>, window_params = [{pipeline_mode = #tpu.pipeline_mode<synchronous>, transform_indices = @transform_0, window_bounds = array<i64: 512, 128>}, {pipeline_mode = #tpu.pipeline_mode<double_buffered>, transform_indices = @transform_1, window_bounds = array<i64: 256, 512>}, {pipeline_mode = #tpu.pipeline_mode<synchronous>, transform_indices = @transform_2, window_bounds = array<i64: 1, 128>}, {pipeline_mode = #tpu.pipeline_mode<synchronous>, transform_indices = @transform_3, window_bounds = array<i64: 8, 2>}, {transform_indices = @transform_4, window_bounds = array<i64: 1, 8, 128>}]} {
    %c0_i32 = arith.constant 0 : i32
    %0 = arith.cmpi eq, %arg1, %c0_i32 : i32
    %1 = arith.extui %0 : i1 to i32
    %c0_i32_0 = arith.constant 0 : i32
    %2 = arith.cmpi ne, %1, %c0_i32_0 : i32
    scf.if %2 {
      %cst_17 = arith.constant 0.000000e+00 : f32
      %33 = vector.broadcast %cst_17 : f32 to vector<8x128xf32>
      %c0_18 = arith.constant 0 : index
      %c0_19 = arith.constant 0 : index
      %c0_20 = arith.constant 0 : index
      %34 = vector.load %arg6[%c0_18, %c0_19, %c0_20] : memref<1x8x128xf32, #tpu.memory_space<vmem>>, vector<1x8x128xf32>
      %35 = vector.shape_cast %34 : vector<1x8x128xf32> to vector<8x128xf32>
      %36 = vector.shape_cast %33 : vector<8x128xf32> to vector<1x8x128xf32>
      tpu.vector_store %arg6[%c0_18, %c0_19, %c0_20], %36 {strides = array<i32>} : memref<1x8x128xf32, #tpu.memory_space<vmem>>, vector<1x8x128xf32>,
    } else {
    }
    %c0 = arith.constant 0 : index
    %c0_1 = arith.constant 0 : index
    %3 = vector.load %arg3[%c0, %c0_1] : memref<256x512xbf16, #tpu.memory_space<vmem>>, vector<256x512xbf16>
    %c0_2 = arith.constant 0 : index
    %c0_3 = arith.constant 0 : index
    %4 = vector.load %arg2[%c0_2, %c0_3] : memref<512x128xbf16, #tpu.memory_space<vmem>>, vector<512x128xbf16>
    %cst = arith.constant dense<0.000000e+00> : vector<256x128xf32>
    %5 = tpu.matmul %3, %4, %cst {dimension_numbers = #tpu.dot_dimension_numbers<[1], [0], [0], [1], [0, 0, 1, 1], [], []>} : vector<256x512xbf16>, vector<512x128xbf16>, vector<256x128xf32> -> vector<256x128xf32>
    %c0_4 = arith.constant 0 : index
    %c0_5 = arith.constant 0 : index
    %6 = vector.load %arg4[%c0_4, %c0_5] : memref<1x128xf32, #tpu.memory_space<vmem>>, vector<1x128xf32>
    %7 = vector.broadcast %6 : vector<1x128xf32> to vector<256x128xf32>
    %8 = arith.addf %5, %7 : vector<256x128xf32>
    %cst_6 = arith.constant 0.000000e+00 : f32
    %9 = vector.broadcast %cst_6 : f32 to vector<256x128xf32>
    %10 = arith.maximumf %8, %9 : vector<256x128xf32>
    %c1_i32 = arith.constant 1 : i32
    %11 = arith.muli %arg0, %c1_i32 : i32
    %12 = arith.addi %11, %arg1 : i32
    %c256_i32 = arith.constant 256 : i32
    %13 = arith.muli %12, %c256_i32 : i32
    %14 = tpu.iota {dimensions = array<i32: 1>} : vector<8x256xi32>
    %15 = vector.broadcast %13 : i32 to vector<8x256xi32>
    %16 = arith.addi %15, %14 : vector<8x256xi32>
    %c0_7 = arith.constant 0 : index
    %c0_8 = arith.constant 0 : index
    %17 = vector.load %arg5[%c0_7, %c0_8] : memref<8x2xi32, #tpu.memory_space<vmem>>, vector<8x1xi32>
    %c0_9 = arith.constant 0 : index
    %c1 = arith.constant 1 : index
    %18 = vector.load %arg5[%c0_9, %c1] : memref<8x2xi32, #tpu.memory_space<vmem>>, vector<8x1xi32>
    %19 = vector.broadcast %17 : vector<8x1xi32> to vector<8x256xi32>
    %20 = arith.cmpi sge, %16, %19 : vector<8x256xi32>
    %21 = vector.broadcast %18 : vector<8x1xi32> to vector<8x256xi32>
    %22 = arith.cmpi slt, %16, %21 : vector<8x256xi32>
    %23 = arith.andi %20, %22 : vector<8x256xi1>
    %24 = arith.extui %23 : vector<8x256xi1> to vector<8x256xi32>
    %25 = arith.sitofp %24 : vector<8x256xi32> to vector<8x256xf32>
    %c0_10 = arith.constant 0 : index
    %c0_11 = arith.constant 0 : index
    %c0_12 = arith.constant 0 : index
    %26 = vector.load %arg6[%c0_10, %c0_11, %c0_12] : memref<1x8x128xf32, #tpu.memory_space<vmem>>, vector<1x8x128xf32>
    %27 = vector.shape_cast %26 : vector<1x8x128xf32> to vector<8x128xf32>
    %cst_13 = arith.constant dense<0.000000e+00> : vector<8x128xf32>
    %28 = tpu.matmul %25, %10, %cst_13 {dimension_numbers = #tpu.dot_dimension_numbers<[1], [0], [0], [1], [0, 0, 1, 1], [], []>} : vector<8x256xf32>, vector<256x128xf32>, vector<8x128xf32> -> vector<8x128xf32>
    %29 = arith.addf %27, %28 : vector<8x128xf32>
    %c0_14 = arith.constant 0 : index
    %c0_15 = arith.constant 0 : index
    %c0_16 = arith.constant 0 : index
    %30 = vector.load %arg6[%c0_14, %c0_15, %c0_16] : memref<1x8x128xf32, #tpu.memory_space<vmem>>, vector<1x8x128xf32>
    %31 = vector.shape_cast %30 : vector<1x8x128xf32> to vector<8x128xf32>
    %32 = vector.shape_cast %29 : vector<8x128xf32> to vector<1x8x128xf32>
    tpu.vector_store %arg6[%c0_14, %c0_15, %c0_16], %32 {strides = array<i32>} : memref<1x8x128xf32, #tpu.memory_space<vmem>>, vector<1x8x128xf32>,
    return
  }
  func.func @transform_0(%arg0: i32, %arg1: i32) -> (i32, i32) {
    %c0_i32 = arith.constant 0 : i32
    %c0_i32_0 = arith.constant 0 : i32
    %c0_i32_1 = arith.constant 0 : i32
    return %c0_i32, %c0_i32_0 : i32, i32
  }
  func.func @transform_1(%arg0: i32, %arg1: i32) -> (i32, i32) {
    %c1_i32 = arith.constant 1 : i32
    %0 = arith.muli %arg0, %c1_i32 : i32
    %1 = arith.addi %0, %arg1 : i32
    %c0_i32 = arith.constant 0 : i32
    %c0_i32_0 = arith.constant 0 : i32
    return %1, %c0_i32 : i32, i32
  }
  func.func @transform_2(%arg0: i32, %arg1: i32) -> (i32, i32) {
    %c0_i32 = arith.constant 0 : i32
    %c0_i32_0 = arith.constant 0 : i32
    %c0_i32_1 = arith.constant 0 : i32
    return %c0_i32, %c0_i32_0 : i32, i32
  }
  func.func @transform_3(%arg0: i32, %arg1: i32) -> (i32, i32) {
    %c0_i32 = arith.constant 0 : i32
    %c0_i32_0 = arith.constant 0 : i32
    %c0_i32_1 = arith.constant 0 : i32
    return %c0_i32, %c0_i32_0 : i32, i32
  }
  func.func @transform_4(%arg0: i32, %arg1: i32) -> (i32, i32, i32) {
    %c0_i32 = arith.constant 0 : i32
    %c0_i32_0 = arith.constant 0 : i32
    %c0_i32_1 = arith.constant 0 : i32
    return %arg0, %c0_i32, %c0_i32_0 : i32, i32, i32
  }
}

</mosaic_0001>

<llo_original>
// kernel: gnn_classifier_forward.1
$region0: #{gnn_classifier_forward.1}
  #allocation0 [shape = 'u32[]', space=smem, size = 0x4, offset = 0x4, fixed_abs, tag = 'smem constant byte address 0x4 - core index']
  #allocation1 [shape = 'u32[144,128]{1,0:T(1,128)}', space=vmem, size = 0x12000, scoped, tag = 'internal scratch']
  %s0 = inlined_call_operand.vmem [shape: bf16[512,128], index: 0, kind: input, shape index: {}]
  %s1 = inlined_call_operand.hbm [shape: bf16[512,512], index: 1, kind: input, shape index: {}]
  %s2 = inlined_call_operand.vmem [shape: f32[1,128], index: 2, kind: input, shape index: {}]
  %s3 = inlined_call_operand.vmem [shape: s32[8,2], index: 3, kind: input, shape index: {}]
  %s4 = inlined_call_operand.vmem [shape: f32[2,8,128], index: 4, kind: output, shape index: {}]
  %s5 = sld [smem:[#allocation0]]
  $region57: #{gnn_classifier_forward.1} parent=0
    _
  %s7 = ssub.s32 1, %s5
  %s8 = scalar_select 0, %s7, %s5
  $region1: #{gnn_classifier_forward.1} parent=0
    #allocation2 [shape = 'u8[524288]{0}', space=vmem, size = 0x80000, scoped, tag = 'input window, operand 1']
    #allocation3 [shape = 's32[2]{0}', space=sflag, size = 0x8, scoped, tag = 'scoped memory for gnn_classifier_forward.1']
    %9 = vsyncpa [#allocation3], 0
    %s10 = scalar_lea.sflag [#allocation3], 1
    %11 = vsyncpa %s10, 0
    loop: start=0, step=1, limit=4
    $region2: #{gnn_classifier_forward.1} parent=1 // loop_pre_header
      _
    $region3: #{gnn_classifier_forward.1} parent=1 // loop_header
      %s13 = sphi 0, %s17
      %p14 = scmp.ge.s32.totalorder %s13, 4
      %s20 = sphi 0, %s32
      %s21 = sphi 0, %s28
      %s22 = sphi 0, %s20
      %s23 = sphi 0, %s21
      %s24 = sphi 0, %s22
      %s25 = sphi 0, %s23
      %s33 = sphi 0, %s33
      %s35 = sphi 0, %s33
      %s36 = sphi 0, %s35
      %s50 = sphi 0, %s36
      %s58 = sphi 0, %s60
      %s61 = sphi 0, %s58
      %s62 = sphi 0, %s61
      %s78 = sphi 0, %s62
      %s82 = sphi 0, %s82
      %s84 = sphi 0, %s82
      %s85 = sphi 0, %s84
      %s99 = sphi 0, %s85
      %s103 = sphi 0, %s103
      %s105 = sphi 0, %s103
      %s106 = sphi 0, %s105
      %s120 = sphi 0, %s106
      %s126 = sphi 0, %s128
      %s129 = sphi 0, %s126
      %s130 = sphi 0, %s129
      %s146 = sphi 0, %s130
    $region4: #{gnn_classifier_forward.1} parent=1 // loop_header_branch
      %16 = sbr.rel (%p14) target = $region8
    $region5: #{gnn_classifier_forward.1} parent=1 // loop_body
      %s18 = ssub.s32 %s13, 1
      %s19 = ssub.s32 %s13, 2
      %s26 = sadd.s32 1, %s21
      %p27 = scmp.ge.s32.totalorder %s26, 1
      %s28 = scalar_select %p27, 0, %s26
      %s29 = sadd.s32 1, %s20
      %s30 = scalar_select %p27, %s29, %s20
      %p31 = scmp.ge.s32.totalorder %s30, 2
      %s32 = scalar_select %p31, 0, %s30
      %s34 = sadd.s32 %s33, 1
      %p37 = scmp.eq.s32.totalorder %s13, 1
      %p38 = scmp.ne.s32.totalorder %s33, %s35
      %p39 = scmp.eq.s32.totalorder %s13, 0
      %p40 = por %p38, %p39
      %p41 = scmp.ne.s32.totalorder %s33, %s35
      %p42 = scmp.eq.s32.totalorder %s18, 1
      %p43 = por %p41, %p42
      %p44 = scmp.ne.s32.totalorder %s35, %s36
      %p45 = scmp.eq.s32.totalorder %s18, 0
      %p46 = por %p44, %p45
      %p47 = scmp.ne.s32.totalorder %s35, %s36
      %p48 = scmp.eq.s32.totalorder %s19, 1
      %p49 = por %p47, %p48
      %p51 = scmp.ne.s32.totalorder %s36, %s50
      %p52 = scmp.eq.s32.totalorder %s19, 0
      %p53 = por %p51, %p52
      %s54 = sadd.s32 %s20, %s21
      %s55 = sadd.s32 %s32, %s28
      %s56 = ssub.s32 %s54, %s55
      %p57 = scmp.eq.s32.totalorder %s56, 0
      %s59 = sadd.s32 %s58, 1
      %s60 = scalar_select %p57, %s58, %s59
      %p63 = pneg %p57
      %p64 = scmp.eq.s32.totalorder %s13, 1
      %p65 = por %p63, %p64
      %p66 = scmp.ne.s32.totalorder %s58, %s61
      %p67 = scmp.eq.s32.totalorder %s13, 0
      %p68 = por %p66, %p67
      %p69 = scmp.ne.s32.totalorder %s58, %s61
      %p70 = scmp.eq.s32.totalorder %s18, 1
      %p71 = por %p69, %p70
      %p72 = scmp.ne.s32.totalorder %s61, %s62
      %p73 = scmp.eq.s32.totalorder %s18, 0
      %p74 = por %p72, %p73
      %p75 = scmp.ne.s32.totalorder %s61, %s62
      %p76 = scmp.eq.s32.totalorder %s19, 1
      %p77 = por %p75, %p76
      %p79 = scmp.ne.s32.totalorder %s62, %s78
      %p80 = scmp.eq.s32.totalorder %s19, 0
      %p81 = por %p79, %p80
      %s83 = sadd.s32 %s82, 1
      %p86 = scmp.eq.s32.totalorder %s13, 1
      %p87 = scmp.ne.s32.totalorder %s82, %s84
      %p88 = scmp.eq.s32.totalorder %s13, 0
      %p89 = por %p87, %p88
      %p90 = scmp.ne.s32.totalorder %s82, %s84
      %p91 = scmp.eq.s32.totalorder %s18, 1
      %p92 = por %p90, %p91
      %p93 = scmp.ne.s32.totalorder %s84, %s85
      %p94 = scmp.eq.s32.totalorder %s18, 0
      %p95 = por %p93, %p94
      %p96 = scmp.ne.s32.totalorder %s84, %s85
      %p97 = scmp.eq.s32.totalorder %s19, 1
      %p98 = por %p96, %p97
      %p100 = scmp.ne.s32.totalorder %s85, %s99
      %p101 = scmp.eq.s32.totalorder %s19, 0
      %p102 = por %p100, %p101
      %s104 = sadd.s32 %s103, 1
      %p107 = scmp.eq.s32.totalorder %s13, 1
      %p108 = scmp.ne.s32.totalorder %s103, %s105
      %p109 = scmp.eq.s32.totalorder %s13, 0
      %p110 = por %p108, %p109
      %p111 = scmp.ne.s32.totalorder %s103, %s105
      %p112 = scmp.eq.s32.totalorder %s18, 1
      %p113 = por %p111, %p112
      %p114 = scmp.ne.s32.totalorder %s105, %s106
      %p115 = scmp.eq.s32.totalorder %s18, 0
      %p116 = por %p114, %p115
      %p117 = scmp.ne.s32.totalorder %s105, %s106
      %p118 = scmp.eq.s32.totalorder %s19, 1
      %p119 = por %p117, %p118
      %p121 = scmp.ne.s32.totalorder %s106, %s120
      %p122 = scmp.eq.s32.totalorder %s19, 0
      %p123 = por %p121, %p122
      %s124 = ssub.s32 %s20, %s32
      %p125 = scmp.eq.s32.totalorder %s124, 0
      %s127 = sadd.s32 %s126, 1
      %s128 = scalar_select %p125, %s126, %s127
      %p131 = pneg %p125
      %p132 = scmp.eq.s32.totalorder %s13, 1
      %p133 = por %p131, %p132
      %p134 = scmp.ne.s32.totalorder %s126, %s129
      %p135 = scmp.eq.s32.totalorder %s13, 0
      %p136 = por %p134, %p135
      %p137 = scmp.ne.s32.totalorder %s126, %s129
      %p138 = scmp.eq.s32.totalorder %s18, 1
      %p139 = por %p137, %p138
      %p140 = scmp.ne.s32.totalorder %s129, %s130
      %p141 = scmp.eq.s32.totalorder %s18, 0
      %p142 = por %p140, %p141
      %p143 = scmp.ne.s32.totalorder %s129, %s130
      %p144 = scmp.eq.s32.totalorder %s19, 1
      %p145 = por %p143, %p144
      %p147 = scmp.ne.s32.totalorder %s130, %s146
      %p148 = scmp.eq.s32.totalorder %s19, 0
      %p149 = por %p147, %p148
      %p150 = scmp.le.s32.totalorder 1, %s13
      %p151 = scmp.lt.s32.totalorder %s13, 3
      %p152 = pnand %p150, %p151
      %p153 = pneg %p152
      // Predicated region
      $region9: #{gnn_classifier_forward.1} parent=5 // pred_check
        _
      $region10: #{gnn_classifier_forward.1} parent=5 // pred_check_branch
        %155 = sbr.rel (%p152) target = $region12
      $region11: #{gnn_classifier_forward.1} parent=5 // pred_region
        %s156 = ssub.s32 %s13, 1
        // Predicated region
        $region13: #{gnn_classifier_forward.1} parent=11 // pred_check
          %p157 = pneg %p46
        $region14: #{gnn_classifier_forward.1} parent=11 // pred_check_branch
          %159 = sbr.rel (%p157) target = $region16
        $region15: #{gnn_classifier_forward.1} parent=11 // pred_region
          _
        $region16: #{gnn_classifier_forward.1} parent=11 // pred_fallthru
          _
        // Predicated region
        $region17: #{gnn_classifier_forward.1} parent=11 // pred_check
          %p160 = pneg %p95
        $region18: #{gnn_classifier_forward.1} parent=11 // pred_check_branch
          %162 = sbr.rel (%p160) target = $region20
        $region19: #{gnn_classifier_forward.1} parent=11 // pred_region
          _
        $region20: #{gnn_classifier_forward.1} parent=11 // pred_fallthru
          _
        // Predicated region
        $region21: #{gnn_classifier_forward.1} parent=11 // pred_check
          %p163 = pneg %p116
        $region22: #{gnn_classifier_forward.1} parent=11 // pred_check_branch
          %165 = sbr.rel (%p163) target = $region24
        $region23: #{gnn_classifier_forward.1} parent=11 // pred_region
          _
        $region24: #{gnn_classifier_forward.1} parent=11 // pred_fallthru
          _
      $region12: #{gnn_classifier_forward.1} parent=5 // pred_fallthru
        _
      %p166 = scmp.lt.s32.totalorder %s13, 2
      // Predicated region
      $region25: #{gnn_classifier_forward.1} parent=5 // pred_check
        %p167 = pneg %p166
      $region26: #{gnn_classifier_forward.1} parent=5 // pred_check_branch
        %169 = sbr.rel (%p167) target = $region28
      $region27: #{gnn_classifier_forward.1} parent=5 // pred_region
        // Predicated region
        $region29: #{gnn_classifier_forward.1} parent=27 // pred_check
          %p170 = pneg %p68
        $region30: #{gnn_classifier_forward.1} parent=27 // pred_check_branch
          %172 = sbr.rel (%p170) target = $region32
        $region31: #{gnn_classifier_forward.1} parent=27 // pred_region
          %s173 = sand.u32 %s58, 1
          %s174 = scalar_lea.sflag [#allocation3], %s173
          %s175 = sand.u32 %s58, 1
          %s176 = smul.addr %s175, 512
          %s177 = scalar_lea.vmem [#allocation2], %s176
          %s178 = sadd.s32 %s20, %s21
          %s179 = smul.u32 32, %s178
          %s181 = ssub.s32 8192, 8192
          %182 = vsyncadd %s174, %s181
          %s183 = smul.addr %s179, 4
          %s184 = smul.addr %s183, 64
          %s185 = scalar_lea.hbm %s1, %s184
          %s186 = sshll.u32 %s177, 4
          %s187 = int_to_ptr.vmem [resolvable:$true] %s186
          %192 = dma.hbm_to_vmem [thread:$0]  %s185, 8192, %s187, %s174, 256, 256, 16
        $region32: #{gnn_classifier_forward.1} parent=27 // pred_fallthru
          _
      $region28: #{gnn_classifier_forward.1} parent=5 // pred_fallthru
        _
      %p193 = scmp.le.s32.totalorder 1, %s13
      %p194 = scmp.lt.s32.totalorder %s13, 3
      %p195 = pnand %p193, %p194
      %p196 = pneg %p195
      // Predicated region
      $region33: #{gnn_classifier_forward.1} parent=5 // pred_check
        _
      $region34: #{gnn_classifier_forward.1} parent=5 // pred_check_branch
        %198 = sbr.rel (%p195) target = $region36
      $region35: #{gnn_classifier_forward.1} parent=5 // pred_region
        %s199 = ssub.s32 %s13, 1
        %s200 = sand.u32 %s61, 1
        %s201 = scalar_lea.sflag [#allocation3], %s200
        %s202 = sand.u32 %s61, 1
        %s203 = smul.addr %s202, 512
        %s204 = scalar_lea.vmem [#allocation2], %s203
        // Predicated region
        $region37: #{gnn_classifier_forward.1} parent=35 // pred_check
          %p205 = pneg %p74
        $region38: #{gnn_classifier_forward.1} parent=35 // pred_check_branch
          %207 = sbr.rel (%p205) target = $region40
        $region39: #{gnn_classifier_forward.1} parent=35 // pred_region
          %208 = dma.done %s201, 8192
        $region40: #{gnn_classifier_forward.1} parent=35 // pred_fallthru
          _
        %p209 = pneg %p46
        %p210 = pneg %p43
        %s211 = sand.u32 %s61, 1
        %s212 = scalar_lea.sflag [#allocation3], %s211
        %s213 = sand.u32 %s61, 1
        %s214 = smul.addr %s213, 512
        %s215 = scalar_lea.vmem [#allocation2], %s214
        %p216 = pneg %p74
        %p217 = pneg %p71
        %p218 = pneg %p95
        %p219 = pneg %p92
        %p220 = pneg %p116
        %p221 = pneg %p113
        %p222 = pneg %p142
        %p223 = pneg %p139
        %p224 = scmp.lt.s32.totalorder %s22, 1
        %s225 = scalar_select %p224, %s22, 1
        %s226 = smul.addr %s225, 8
        %s227 = scalar_lea.vmem %s4, %s226
        %s228 = sadd.s32 %s22, %s23
        %s229 = smul.u32 32, %s228
        %p230 = scmp.lt.s32.totalorder %s22, 1
        %s231 = scalar_select %p230, %s22, 1
        %s232 = smul.addr %s231, 8
        %s233 = scalar_lea.vmem %s4, %s232
        %p235 = scmp.eq.s32.totalorder %s23, 0
        // Predicated region
        $region41: #{gnn_classifier_forward.1} parent=35 // pred_check
          %p236 = pneg %p235
        $region42: #{gnn_classifier_forward.1} parent=35 // pred_check_branch
          %238 = sbr.rel (%p236) target = $region44
        $region43: #{gnn_classifier_forward.1} parent=35 // pred_region
          %239 = vst [vmem:[%s233] sm:$0xff] 0.0
        $region44: #{gnn_classifier_forward.1} parent=35 // pred_fallthru
          _
        %v240 = vld [vmem:[%s204] sm:$0xff]
        %v241 = vld [vmem:[%s204 + $0x8] sm:$0xff]
        %v242 = vld [vmem:[%s204 + $0x10] sm:$0xff]
        %v243 = vld [vmem:[%s204 + $0x18] sm:$0xff]
        %v244 = vld [vmem:[%s204 + $0x20] sm:$0xff]
        %v245 = vld [vmem:[%s204 + $0x28] sm:$0xff]
        %v246 = vld [vmem:[%s204 + $0x30] sm:$0xff]
        %v247 = vld [vmem:[%s204 + $0x38] sm:$0xff]
        %v248 = vld [vmem:[%s204 + $0x40] sm:$0xff]
        %v249 = vld [vmem:[%s204 + $0x48] sm:$0xff]
        %v250 = vld [vmem:[%s204 + $0x50] sm:$0xff]
        %v251 = vld [vmem:[%s204 + $0x58] sm:$0xff]
        %v252 = vld [vmem:[%s204 + $0x60] sm:$0xff]
        %v253 = vld [vmem:[%s204 + $0x68] sm:$0xff]
        %v254 = vld [vmem:[%s204 + $0x70] sm:$0xff]
        %v255 = vld [vmem:[%s204 + $0x78] sm:$0xff]
        %v256 = vld [vmem:[%s204 + $0x80] sm:$0xff]
        %v257 = vld [vmem:[%s204 + $0x88] sm:$0xff]
        %v258 = vld [vmem:[%s204 + $0x90] sm:$0xff]
        %v259 = vld [vmem:[%s204 + $0x98] sm:$0xff]
        %v260 = vld [vmem:[%s204 + $0xa0] sm:$0xff]
        %v261 = vld [vmem:[%s204 + $0xa8] sm:$0xff]
        %v262 = vld [vmem:[%s204 + $0xb0] sm:$0xff]
        %v263 = vld [vmem:[%s204 + $0xb8] sm:$0xff]
        %v264 = vld [vmem:[%s204 + $0xc0] sm:$0xff]
        %v265 = vld [vmem:[%s204 + $0xc8] sm:$0xff]
        %v266 = vld [vmem:[%s204 + $0xd0] sm:$0xff]
        %v267 = vld [vmem:[%s204 + $0xd8] sm:$0xff]
        %v268 = vld [vmem:[%s204 + $0xe0] sm:$0xff]
        %v269 = vld [vmem:[%s204 + $0xe8] sm:$0xff]
        %v270 = vld [vmem:[%s204 + $0xf0] sm:$0xff]
        %v271 = vld [vmem:[%s204 + $0xf8] sm:$0xff]
        %v272 = vld [vmem:[%s204 + $0x100] sm:$0xff]
        %v273 = vld [vmem:[%s204 + $0x108] sm:$0xff]
        %v274 = vld [vmem:[%s204 + $0x110] sm:$0xff]
        %v275 = vld [vmem:[%s204 + $0x118] sm:$0xff]
        %v276 = vld [vmem:[%s204 + $0x120] sm:$0xff]
        %v277 = vld [vmem:[%s204 + $0x128] sm:$0xff]
        %v278 = vld [vmem:[%s204 + $0x130] sm:$0xff]
        %v279 = vld [vmem:[%s204 + $0x138] sm:$0xff]
        %v280 = vld [vmem:[%s204 + $0x140] sm:$0xff]
        %v281 = vld [vmem:[%s204 + $0x148] sm:$0xff]
        %v282 = vld [vmem:[%s204 + $0x150] sm:$0xff]
        %v283 = vld [vmem:[%s204 + $0x158] sm:$0xff]
        %v284 = vld [vmem:[%s204 + $0x160] sm:$0xff]
        %v285 = vld [vmem:[%s204 + $0x168] sm:$0xff]
        %v286 = vld [vmem:[%s204 + $0x170] sm:$0xff]
        %v287 = vld [vmem:[%s204 + $0x178] sm:$0xff]
        %v288 = vld [vmem:[%s204 + $0x180] sm:$0xff]
        %v289 = vld [vmem:[%s204 + $0x188] sm:$0xff]
        %v290 = vld [vmem:[%s204 + $0x190] sm:$0xff]
        %v291 = vld [vmem:[%s204 + $0x198] sm:$0xff]
        %v292 = vld [vmem:[%s204 + $0x1a0] sm:$0xff]
        %v293 = vld [vmem:[%s204 + $0x1a8] sm:$0xff]
        %v294 = vld [vmem:[%s204 + $0x1b0] sm:$0xff]
        %v295 = vld [vmem:[%s204 + $0x1b8] sm:$0xff]
        %v296 = vld [vmem:[%s204 + $0x1c0] sm:$0xff]
        %v297 = vld [vmem:[%s204 + $0x1c8] sm:$0xff]
        %v298 = vld [vmem:[%s204 + $0x1d0] sm:$0xff]
        %v299 = vld [vmem:[%s204 + $0x1d8] sm:$0xff]
        %v300 = vld [vmem:[%s204 + $0x1e0] sm:$0xff]
        %v301 = vld [vmem:[%s204 + $0x1e8] sm:$0xff]
        %v302 = vld [vmem:[%s204 + $0x1f0] sm:$0xff]
        %v303 = vld [vmem:[%s204 + $0x1f8] sm:$0xff]
        %v304 = vld [vmem:[%s0] sm:$0xf]
        %v305 = vld [vmem:[%s0 + $0x4] sm:$0xf]
        %v306 = vld [vmem:[%s0 + $0x8] sm:$0xf]
        %v307 = vld [vmem:[%s0 + $0xc] sm:$0xf]
        %v308 = vld [vmem:[%s0 + $0x10] sm:$0xf]
        %v309 = vld [vmem:[%s0 + $0x14] sm:$0xf]
        %v310 = vld [vmem:[%s0 + $0x18] sm:$0xf]
        %v311 = vld [vmem:[%s0 + $0x1c] sm:$0xf]
        %v312 = vld [vmem:[%s0 + $0x20] sm:$0xf]
        %v313 = vld [vmem:[%s0 + $0x24] sm:$0xf]
        %v314 = vld [vmem:[%s0 + $0x28] sm:$0xf]
        %v315 = vld [vmem:[%s0 + $0x2c] sm:$0xf]
        %v316 = vld [vmem:[%s0 + $0x30] sm:$0xf]
        %v317 = vld [vmem:[%s0 + $0x34] sm:$0xf]
        %v318 = vld [vmem:[%s0 + $0x38] sm:$0xf]
        %v319 = vld [vmem:[%s0 + $0x3c] sm:$0xf]
        %v320 = vld [vmem:[%s0 + $0x40] sm:$0xf]
        %v321 = vld [vmem:[%s0 + $0x44] sm:$0xf]
        %v322 = vld [vmem:[%s0 + $0x48] sm:$0xf]
        %v323 = vld [vmem:[%s0 + $0x4c] sm:$0xf]
        %v324 = vld [vmem:[%s0 + $0x50] sm:$0xf]
        %v325 = vld [vmem:[%s0 + $0x54] sm:$0xf]
        %v326 = vld [vmem:[%s0 + $0x58] sm:$0xf]
        %v327 = vld [vmem:[%s0 + $0x5c] sm:$0xf]
        %v328 = vld [vmem:[%s0 + $0x60] sm:$0xf]
        %v329 = vld [vmem:[%s0 + $0x64] sm:$0xf]
        %v330 = vld [vmem:[%s0 + $0x68] sm:$0xf]
        %v331 = vld [vmem:[%s0 + $0x6c] sm:$0xf]
        %v332 = vld [vmem:[%s0 + $0x70] sm:$0xf]
        %v333 = vld [vmem:[%s0 + $0x74] sm:$0xf]
        %v334 = vld [vmem:[%s0 + $0x78] sm:$0xf]
        %v335 = vld [vmem:[%s0 + $0x7c] sm:$0xf]
        %v336 = vld [vmem:[%s0 + $0x80] sm:$0xf]
        %v337 = vld [vmem:[%s0 + $0x84] sm:$0xf]
        %v338 = vld [vmem:[%s0 + $0x88] sm:$0xf]
        %v339 = vld [vmem:[%s0 + $0x8c] sm:$0xf]
        %v340 = vld [vmem:[%s0 + $0x90] sm:$0xf]
        %v341 = vld [vmem:[%s0 + $0x94] sm:$0xf]
        %v342 = vld [vmem:[%s0 + $0x98] sm:$0xf]
        %v343 = vld [vmem:[%s0 + $0x9c] sm:$0xf]
        %v344 = vld [vmem:[%s0 + $0xa0] sm:$0xf]
        %v345 = vld [vmem:[%s0 + $0xa4] sm:$0xf]
        %v346 = vld [vmem:[%s0 + $0xa8] sm:$0xf]
        %v347 = vld [vmem:[%s0 + $0xac] sm:$0xf]
        %v348 = vld [vmem:[%s0 + $0xb0] sm:$0xf]
        %v349 = vld [vmem:[%s0 + $0xb4] sm:$0xf]
        %v350 = vld [vmem:[%s0 + $0xb8] sm:$0xf]
        %v351 = vld [vmem:[%s0 + $0xbc] sm:$0xf]
        %v352 = vld [vmem:[%s0 + $0xc0] sm:$0xf]
        %v353 = vld [vmem:[%s0 + $0xc4] sm:$0xf]
        %v354 = vld [vmem:[%s0 + $0xc8] sm:$0xf]
        %v355 = vld [vmem:[%s0 + $0xcc] sm:$0xf]
        %v356 = vld [vmem:[%s0 + $0xd0] sm:$0xf]
        %v357 = vld [vmem:[%s0 + $0xd4] sm:$0xf]
        %v358 = vld [vmem:[%s0 + $0xd8] sm:$0xf]
        %v359 = vld [vmem:[%s0 + $0xdc] sm:$0xf]
        %v360 = vld [vmem:[%s0 + $0xe0] sm:$0xf]
        %v361 = vld [vmem:[%s0 + $0xe4] sm:$0xf]
        %v362 = vld [vmem:[%s0 + $0xe8] sm:$0xf]
        %v363 = vld [vmem:[%s0 + $0xec] sm:$0xf]
        %v364 = vld [vmem:[%s0 + $0xf0] sm:$0xf]
        %v365 = vld [vmem:[%s0 + $0xf4] sm:$0xf]
        %v366 = vld [vmem:[%s0 + $0xf8] sm:$0xf]
        %v367 = vld [vmem:[%s0 + $0xfc] sm:$0xf]
        %v368 = vld [vmem:[%s2] sm:$0x1]
        %v370 = vlaneseq
        %v371 = vshrl.u32 %v370, 7
        %v372 = vsub.s32 0, %v371
        %v373 = vrot.slane %v368, %v372
        %v439 = vunpack.c.l.b16 %v240
        %v440 = vunpack.c.h.b16 %v240
        %v441 = vunpack.c.l.b16 %v241
        %v442 = vunpack.c.h.b16 %v241
        %v443 = vunpack.c.l.b16 %v242
        %v444 = vunpack.c.h.b16 %v242
        %v445 = vunpack.c.l.b16 %v243
        %v446 = vunpack.c.h.b16 %v243
        %v447 = vunpack.c.l.b16 %v244
        %v448 = vunpack.c.h.b16 %v244
        %v449 = vunpack.c.l.b16 %v245
        %v450 = vunpack.c.h.b16 %v245
        %v451 = vunpack.c.l.b16 %v246
        %v452 = vunpack.c.h.b16 %v246
        %v453 = vunpack.c.l.b16 %v247
        %v454 = vunpack.c.h.b16 %v247
        %v455 = vunpack.c.l.b16 %v248
        %v456 = vunpack.c.h.b16 %v248
        %v457 = vunpack.c.l.b16 %v249
        %v458 = vunpack.c.h.b16 %v249
        %v459 = vunpack.c.l.b16 %v250
        %v460 = vunpack.c.h.b16 %v250
        %v461 = vunpack.c.l.b16 %v251
        %v462 = vunpack.c.h.b16 %v251
        %v463 = vunpack.c.l.b16 %v252
        %v464 = vunpack.c.h.b16 %v252
        %v465 = vunpack.c.l.b16 %v253
        %v466 = vunpack.c.h.b16 %v253
        %v467 = vunpack.c.l.b16 %v254
        %v468 = vunpack.c.h.b16 %v254
        %v469 = vunpack.c.l.b16 %v255
        %v470 = vunpack.c.h.b16 %v255
        %v471 = vunpack.c.l.b16 %v256
        %v472 = vunpack.c.h.b16 %v256
        %v473 = vunpack.c.l.b16 %v257
        %v474 = vunpack.c.h.b16 %v257
        %v475 = vunpack.c.l.b16 %v258
        %v476 = vunpack.c.h.b16 %v258
        %v477 = vunpack.c.l.b16 %v259
        %v478 = vunpack.c.h.b16 %v259
        %v479 = vunpack.c.l.b16 %v260
        %v480 = vunpack.c.h.b16 %v260
        %v481 = vunpack.c.l.b16 %v261
        %v482 = vunpack.c.h.b16 %v261
        %v483 = vunpack.c.l.b16 %v262
        %v484 = vunpack.c.h.b16 %v262
        %v485 = vunpack.c.l.b16 %v263
        %v486 = vunpack.c.h.b16 %v263
        %v487 = vunpack.c.l.b16 %v264
        %v488 = vunpack.c.h.b16 %v264
        %v489 = vunpack.c.l.b16 %v265
        %v490 = vunpack.c.h.b16 %v265
        %v491 = vunpack.c.l.b16 %v266
        %v492 = vunpack.c.h.b16 %v266
        %v493 = vunpack.c.l.b16 %v267
        %v494 = vunpack.c.h.b16 %v267
        %v495 = vunpack.c.l.b16 %v268
        %v496 = vunpack.c.h.b16 %v268
        %v497 = vunpack.c.l.b16 %v269
        %v498 = vunpack.c.h.b16 %v269
        %v499 = vunpack.c.l.b16 %v270
        %v500 = vunpack.c.h.b16 %v270
        %v501 = vunpack.c.l.b16 %v271
        %v502 = vunpack.c.h.b16 %v271
        %v503 = vunpack.c.l.b16 %v272
        %v504 = vunpack.c.h.b16 %v272
        %v505 = vunpack.c.l.b16 %v273
        %v506 = vunpack.c.h.b16 %v273
        %v507 = vunpack.c.l.b16 %v274
        %v508 = vunpack.c.h.b16 %v274
        %v509 = vunpack.c.l.b16 %v275
        %v510 = vunpack.c.h.b16 %v275
        %v511 = vunpack.c.l.b16 %v276
        %v512 = vunpack.c.h.b16 %v276
        %v513 = vunpack.c.l.b16 %v277
        %v514 = vunpack.c.h.b16 %v277
        %v515 = vunpack.c.l.b16 %v278
        %v516 = vunpack.c.h.b16 %v278
        %v517 = vunpack.c.l.b16 %v279
        %v518 = vunpack.c.h.b16 %v279
        %v519 = vunpack.c.l.b16 %v280
        %v520 = vunpack.c.h.b16 %v280
        %v521 = vunpack.c.l.b16 %v281
        %v522 = vunpack.c.h.b16 %v281
        %v523 = vunpack.c.l.b16 %v282
        %v524 = vunpack.c.h.b16 %v282
        %v525 = vunpack.c.l.b16 %v283
        %v526 = vunpack.c.h.b16 %v283
        %v527 = vunpack.c.l.b16 %v284
        %v528 = vunpack.c.h.b16 %v284
        %v529 = vunpack.c.l.b16 %v285
        %v530 = vunpack.c.h.b16 %v285
        %v531 = vunpack.c.l.b16 %v286
        %v532 = vunpack.c.h.b16 %v286
        %v533 = vunpack.c.l.b16 %v287
        %v534 = vunpack.c.h.b16 %v287
        %v535 = vunpack.c.l.b16 %v288
        %v536 = vunpack.c.h.b16 %v288
        %v537 = vunpack.c.l.b16 %v289
        %v538 = vunpack.c.h.b16 %v289
        %v539 = vunpack.c.l.b16 %v290
        %v540 = vunpack.c.h.b16 %v290
        %v541 = vunpack.c.l.b16 %v291
        %v542 = vunpack.c.h.b16 %v291
        %v543 = vunpack.c.l.b16 %v292
        %v544 = vunpack.c.h.b16 %v292
        %v545 = vunpack.c.l.b16 %v293
        %v546 = vunpack.c.h.b16 %v293
        %v547 = vunpack.c.l.b16 %v294
        %v548 = vunpack.c.h.b16 %v294
        %v549 = vunpack.c.l.b16 %v295
        %v550 = vunpack.c.h.b16 %v295
        %v551 = vunpack.c.l.b16 %v296
        %v552 = vunpack.c.h.b16 %v296
        %v553 = vunpack.c.l.b16 %v297
        %v554 = vunpack.c.h.b16 %v297
        %v555 = vunpack.c.l.b16 %v298
        %v556 = vunpack.c.h.b16 %v298
        %v557 = vunpack.c.l.b16 %v299
        %v558 = vunpack.c.h.b16 %v299
        %v559 = vunpack.c.l.b16 %v300
        %v560 = vunpack.c.h.b16 %v300
        %v561 = vunpack.c.l.b16 %v301
        %v562 = vunpack.c.h.b16 %v301
        %v563 = vunpack.c.l.b16 %v302
        %v564 = vunpack.c.h.b16 %v302
        %v565 = vunpack.c.l.b16 %v303
        %v566 = vunpack.c.h.b16 %v303
        %v567 = vpack.c.b16 %v443, %v439
        %v568 = vpack.c.b16 %v444, %v440
        %v569 = vpack.c.b16 %v445, %v441
        %v570 = vpack.c.b16 %v446, %v442
        %v571 = vpack.c.b16 %v451, %v447
        %v572 = vpack.c.b16 %v452, %v448
        %v573 = vpack.c.b16 %v453, %v449
        %v574 = vpack.c.b16 %v454, %v450
        %v575 = vpack.c.b16 %v459, %v455
        %v576 = vpack.c.b16 %v460, %v456
        %v577 = vpack.c.b16 %v461, %v457
        %v578 = vpack.c.b16 %v462, %v458
        %v579 = vpack.c.b16 %v467, %v463
        %v580 = vpack.c.b16 %v468, %v464
        %v581 = vpack.c.b16 %v469, %v465
        %v582 = vpack.c.b16 %v470, %v466
        %v583 = vpack.c.b16 %v475, %v471
        %v584 = vpack.c.b16 %v476, %v472
        %v585 = vpack.c.b16 %v477, %v473
        %v586 = vpack.c.b16 %v478, %v474
        %v587 = vpack.c.b16 %v483, %v479
        %v588 = vpack.c.b16 %v484, %v480
        %v589 = vpack.c.b16 %v485, %v481
        %v590 = vpack.c.b16 %v486, %v482
        %v591 = vpack.c.b16 %v491, %v487
        %v592 = vpack.c.b16 %v492, %v488
        %v593 = vpack.c.b16 %v493, %v489
        %v594 = vpack.c.b16 %v494, %v490
        %v595 = vpack.c.b16 %v499, %v495
        %v596 = vpack.c.b16 %v500, %v496
        %v597 = vpack.c.b16 %v501, %v497
        %v598 = vpack.c.b16 %v502, %v498
        %v599 = vpack.c.b16 %v507, %v503
        %v600 = vpack.c.b16 %v508, %v504
        %v601 = vpack.c.b16 %v509, %v505
        %v602 = vpack.c.b16 %v510, %v506
        %v603 = vpack.c.b16 %v515, %v511
        %v604 = vpack.c.b16 %v516, %v512
        %v605 = vpack.c.b16 %v517, %v513
        %v606 = vpack.c.b16 %v518, %v514
        %v607 = vpack.c.b16 %v523, %v519
        %v608 = vpack.c.b16 %v524, %v520
        %v609 = vpack.c.b16 %v525, %v521
        %v610 = vpack.c.b16 %v526, %v522
        %v611 = vpack.c.b16 %v531, %v527
        %v612 = vpack.c.b16 %v532, %v528
        %v613 = vpack.c.b16 %v533, %v529
        %v614 = vpack.c.b16 %v534, %v530
        %v615 = vpack.c.b16 %v539, %v535
        %v616 = vpack.c.b16 %v540, %v536
        %v617 = vpack.c.b16 %v541, %v537
        %v618 = vpack.c.b16 %v542, %v538
        %v619 = vpack.c.b16 %v547, %v543
        %v620 = vpack.c.b16 %v548, %v544
        %v621 = vpack.c.b16 %v549, %v545
        %v622 = vpack.c.b16 %v550, %v546
        %v623 = vpack.c.b16 %v555, %v551
        %v624 = vpack.c.b16 %v556, %v552
        %v625 = vpack.c.b16 %v557, %v553
        %v626 = vpack.c.b16 %v558, %v554
        %v627 = vpack.c.b16 %v563, %v559
        %v628 = vpack.c.b16 %v564, %v560
        %v629 = vpack.c.b16 %v565, %v561
        %v630 = vpack.c.b16 %v566, %v562
        %v759 = vunpack.c.l.b16 %v304
        %v760 = vunpack.c.l.b16 %v305
        %v761 = vunpack.c.l.b16 %v306
        %v762 = vunpack.c.l.b16 %v307
        %v763 = vunpack.c.l.b16 %v308
        %v764 = vunpack.c.l.b16 %v309
        %v765 = vunpack.c.l.b16 %v310
        %v766 = vunpack.c.l.b16 %v311
        %v767 = vunpack.c.l.b16 %v312
        %v768 = vunpack.c.l.b16 %v313
        %v769 = vunpack.c.l.b16 %v314
        %v770 = vunpack.c.l.b16 %v315
        %v771 = vunpack.c.l.b16 %v316
        %v772 = vunpack.c.l.b16 %v317
        %v773 = vunpack.c.l.b16 %v318
        %v774 = vunpack.c.l.b16 %v319
        %v775 = vunpack.c.l.b16 %v320
        %v776 = vunpack.c.l.b16 %v321
        %v777 = vunpack.c.l.b16 %v322
        %v778 = vunpack.c.l.b16 %v323
        %v779 = vunpack.c.l.b16 %v324
        %v780 = vunpack.c.l.b16 %v325
        %v781 = vunpack.c.l.b16 %v326
        %v782 = vunpack.c.l.b16 %v327
        %v783 = vunpack.c.l.b16 %v328
        %v784 = vunpack.c.l.b16 %v329
        %v785 = vunpack.c.l.b16 %v330
        %v786 = vunpack.c.l.b16 %v331
        %v787 = vunpack.c.l.b16 %v332
        %v788 = vunpack.c.l.b16 %v333
        %v789 = vunpack.c.l.b16 %v334
        %v790 = vunpack.c.l.b16 %v335
        %v791 = vunpack.c.l.b16 %v336
        %v792 = vunpack.c.l.b16 %v337
        %v793 = vunpack.c.l.b16 %v338
        %v794 = vunpack.c.l.b16 %v339
        %v795 = vunpack.c.l.b16 %v340
        %v796 = vunpack.c.l.b16 %v341
        %v797 = vunpack.c.l.b16 %v342
        %v798 = vunpack.c.l.b16 %v343
        %v799 = vunpack.c.l.b16 %v344
        %v800 = vunpack.c.l.b16 %v345
        %v801 = vunpack.c.l.b16 %v346
        %v802 = vunpack.c.l.b16 %v347
        %v803 = vunpack.c.l.b16 %v348
        %v804 = vunpack.c.l.b16 %v349
        %v805 = vunpack.c.l.b16 %v350
        %v806 = vunpack.c.l.b16 %v351
        %v807 = vunpack.c.l.b16 %v352
        %v808 = vunpack.c.l.b16 %v353
        %v809 = vunpack.c.l.b16 %v354
        %v810 = vunpack.c.l.b16 %v355
        %v811 = vunpack.c.l.b16 %v356
        %v812 = vunpack.c.l.b16 %v357
        %v813 = vunpack.c.l.b16 %v358
        %v814 = vunpack.c.l.b16 %v359
        %v815 = vunpack.c.l.b16 %v360
        %v816 = vunpack.c.l.b16 %v361
        %v817 = vunpack.c.l.b16 %v362
        %v818 = vunpack.c.l.b16 %v363
        %v819 = vunpack.c.l.b16 %v364
        %v820 = vunpack.c.l.b16 %v365
        %v821 = vunpack.c.l.b16 %v366
        %v822 = vunpack.c.l.b16 %v367
        %v823 = vpack.c.b16 %v760, %v759
        %v824 = vpack.c.b16 %v762, %v761
        %v825 = vpack.c.b16 %v764, %v763
        %v826 = vpack.c.b16 %v766, %v765
        %v827 = vpack.c.b16 %v768, %v767
        %v828 = vpack.c.b16 %v770, %v769
        %v829 = vpack.c.b16 %v772, %v771
        %v830 = vpack.c.b16 %v774, %v773
        %v831 = vpack.c.b16 %v776, %v775
        %v832 = vpack.c.b16 %v778, %v777
        %v833 = vpack.c.b16 %v780, %v779
        %v834 = vpack.c.b16 %v782, %v781
        %v835 = vpack.c.b16 %v784, %v783
        %v836 = vpack.c.b16 %v786, %v785
        %v837 = vpack.c.b16 %v788, %v787
        %v838 = vpack.c.b16 %v790, %v789
        %v839 = vpack.c.b16 %v792, %v791
        %v840 = vpack.c.b16 %v794, %v793
        %v841 = vpack.c.b16 %v796, %v795
        %v842 = vpack.c.b16 %v798, %v797
        %v843 = vpack.c.b16 %v800, %v799
        %v844 = vpack.c.b16 %v802, %v801
        %v845 = vpack.c.b16 %v804, %v803
        %v846 = vpack.c.b16 %v806, %v805
        %v847 = vpack.c.b16 %v808, %v807
        %v848 = vpack.c.b16 %v810, %v809
        %v849 = vpack.c.b16 %v812, %v811
        %v850 = vpack.c.b16 %v814, %v813
        %v851 = vpack.c.b16 %v816, %v815
        %v852 = vpack.c.b16 %v818, %v817
        %v853 = vpack.c.b16 %v820, %v819
        %v854 = vpack.c.b16 %v822, %v821
        %887 = vmatprep.subr.bf16.mxu0 0
        %888 = vmatpush1.bf16.msra.mxu0 %v823
        %889 = vmatprep.subr.bf16.mxu0 0
        %890 = vmatpush1.bf16.msra.mxu0 %v824
        %891 = vmatprep.subr.bf16.mxu0 0
        %892 = vmatpush1.bf16.msra.mxu0 %v825
        %893 = vmatprep.subr.bf16.mxu0 0
        %894 = vmatpush1.bf16.msra.mxu0 %v826
        %895 = vmatprep.subr.bf16.mxu0 0
        %896 = vmatpush1.bf16.msra.mxu0 %v827
        %897 = vmatprep.subr.bf16.mxu0 0
        %898 = vmatpush1.bf16.msra.mxu0 %v828
        %899 = vmatprep.subr.bf16.mxu0 0
        %900 = vmatpush1.bf16.msra.mxu0 %v829
        %901 = vmatprep.subr.bf16.mxu0 0
        %902 = vmatpush1.bf16.msra.mxu0 %v830
        %903 = vmatprep.subr.bf16.mxu0 0
        %904 = vmatpush1.bf16.msra.mxu0 %v831
        %905 = vmatprep.subr.bf16.mxu0 0
        %906 = vmatpush1.bf16.msra.mxu0 %v832
        %907 = vmatprep.subr.bf16.mxu0 0
        %908 = vmatpush1.bf16.msra.mxu0 %v833
        %909 = vmatprep.subr.bf16.mxu0 0
        %910 = vmatpush1.bf16.msra.mxu0 %v834
        %911 = vmatprep.subr.bf16.mxu0 0
        %912 = vmatpush1.bf16.msra.mxu0 %v835
        %913 = vmatprep.subr.bf16.mxu0 0
        %914 = vmatpush1.bf16.msra.mxu0 %v836
        %915 = vmatprep.subr.bf16.mxu0 0
        %916 = vmatpush1.bf16.msra.mxu0 %v837
        %917 = vmatprep.subr.bf16.mxu0 0
        %918 = vmatpush1.bf16.msra.mxu0 %v838
        %919 = vmatprep.mubr.bf16.mxu0 %v568
        %920 = vmatmul.mubr.bf16.gmra.mrb[0].mxu0 %v567
        %v921 = vpop.f32.mrb[0].mxu0
        %v922 = vadd.f32 %v373, %v921
        %v923 = vpop.f32.mrb[0].mxu0
        %v924 = vpop.f32.mrb[0].mxu0
        %v925 = vadd.f32 %v373, %v924
        %v926 = vpop.f32.mrb[0].mxu0
        %927 = vmatprep.mubr.bf16.mxu0 %v572
        %928 = vmatmul.mubr.bf16.gmra.mrb[0].mxu0 %v571
        %v929 = vpop.f32.mrb[0].mxu0
        %v930 = vadd.f32 %v373, %v929
        %v931 = vpop.f32.mrb[0].mxu0
        %v932 = vpop.f32.mrb[0].mxu0
        %v933 = vadd.f32 %v373, %v932
        %v934 = vpop.f32.mrb[0].mxu0
        %935 = vmatprep.mubr.bf16.mxu0 %v576
        %936 = vmatmul.mubr.bf16.gmra.mrb[0].mxu0 %v575
        %v937 = vpop.f32.mrb[0].mxu0
        %v938 = vadd.f32 %v373, %v937
        %v939 = vpop.f32.mrb[0].mxu0
        %v940 = vpop.f32.mrb[0].mxu0
        %v941 = vadd.f32 %v373, %v940
        %v942 = vpop.f32.mrb[0].mxu0
        %943 = vmatprep.mubr.bf16.mxu0 %v580
        %944 = vmatmul.mubr.bf16.gmra.mrb[0].mxu0 %v579
        %v945 = vpop.f32.mrb[0].mxu0
        %v946 = vadd.f32 %v373, %v945
        %v947 = vpop.f32.mrb[0].mxu0
        %v948 = vpop.f32.mrb[0].mxu0
        %v949 = vadd.f32 %v373, %v948
        %v950 = vpop.f32.mrb[0].mxu0
        %951 = vmatprep.mubr.bf16.mxu0 %v584
        %952 = vmatmul.mubr.bf16.gmra.mrb[0].mxu0 %v583
        %v953 = vpop.f32.mrb[0].mxu0
        %v954 = vadd.f32 %v373, %v953
        %v955 = vpop.f32.mrb[0].mxu0
        %v956 = vpop.f32.mrb[0].mxu0
        %v957 = vadd.f32 %v373, %v956
        %v958 = vpop.f32.mrb[0].mxu0
        %959 = vmatprep.mubr.bf16.mxu0 %v588
        %960 = vmatmul.mubr.bf16.gmra.mrb[0].mxu0 %v587
        %v961 = vpop.f32.mrb[0].mxu0
        %v962 = vadd.f32 %v373, %v961
        %v963 = vpop.f32.mrb[0].mxu0
        %v964 = vpop.f32.mrb[0].mxu0
        %v965 = vadd.f32 %v373, %v964
        %v966 = vpop.f32.mrb[0].mxu0
        %967 = vmatprep.mubr.bf16.mxu0 %v592
        %968 = vmatmul.mubr.bf16.gmra.mrb[0].mxu0 %v591
        %v969 = vpop.f32.mrb[0].mxu0
        %v970 = vadd.f32 %v373, %v969
        %v971 = vpop.f32.mrb[0].mxu0
        %v972 = vpop.f32.mrb[0].mxu0
        %v973 = vadd.f32 %v373, %v972
        %v974 = vpop.f32.mrb[0].mxu0
        %975 = vmatprep.mubr.bf16.mxu0 %v596
        %976 = vmatmul.mubr.bf16.gmra.mrb[0].mxu0 %v595
        %v977 = vpop.f32.mrb[0].mxu0
        %v978 = vadd.f32 %v373, %v977
        %v979 = vpop.f32.mrb[0].mxu0
        %v980 = vpop.f32.mrb[0].mxu0
        %v981 = vadd.f32 %v373, %v980
        %v982 = vpop.f32.mrb[0].mxu0
        %983 = vmatprep.mubr.bf16.mxu0 %v600
        %984 = vmatmul.mubr.bf16.gmra.mrb[0].mxu0 %v599
        %v985 = vpop.f32.mrb[0].mxu0
        %v986 = vadd.f32 %v373, %v985
        %v987 = vpop.f32.mrb[0].mxu0
        %v988 = vpop.f32.mrb[0].mxu0
        %v989 = vadd.f32 %v373, %v988
        %v990 = vpop.f32.mrb[0].mxu0
        %991 = vmatprep.mubr.bf16.mxu0 %v604
        %992 = vmatmul.mubr.bf16.gmra.mrb[0].mxu0 %v603
        %v993 = vpop.f32.mrb[0].mxu0
        %v994 = vadd.f32 %v373, %v993
        %v995 = vpop.f32.mrb[0].mxu0
        %v996 = vpop.f32.mrb[0].mxu0
        %v997 = vadd.f32 %v373, %v996
        %v998 = vpop.f32.mrb[0].mxu0
        %999 = vmatprep.mubr.bf16.mxu0 %v608
        %1000 = vmatmul.mubr.bf16.gmra.mrb[0].mxu0 %v607
        %v1001 = vpop.f32.mrb[0].mxu0
        %v1002 = vadd.f32 %v373, %v1001
        %v1003 = vpop.f32.mrb[0].mxu0
        %v1004 = vpop.f32.mrb[0].mxu0
        %v1005 = vadd.f32 %v373, %v1004
        %v1006 = vpop.f32.mrb[0].mxu0
        %1007 = vmatprep.mubr.bf16.mxu0 %v612
        %1008 = vmatmul.mubr.bf16.gmra.mrb[0].mxu0 %v611
        %v1009 = vpop.f32.mrb[0].mxu0
        %v1010 = vadd.f32 %v373, %v1009
        %v1011 = vpop.f32.mrb[0].mxu0
        %v1012 = vpop.f32.mrb[0].mxu0
        %v1013 = vadd.f32 %v373, %v1012
        %v1014 = vpop.f32.mrb[0].mxu0
        %1015 = vmatprep.mubr.bf16.mxu0 %v616
        %1016 = vmatmul.mubr.bf16.gmra.mrb[0].mxu0 %v615
        %v1017 = vpop.f32.mrb[0].mxu0
        %v1018 = vadd.f32 %v373, %v1017
        %v1019 = vpop.f32.mrb[0].mxu0
        %v1020 = vpop.f32.mrb[0].mxu0
        %v1021 = vadd.f32 %v373, %v1020
        %v1022 = vpop.f32.mrb[0].mxu0
        %1023 = vmatprep.mubr.bf16.mxu0 %v620
        %1024 = vmatmul.mubr.bf16.gmra.mrb[0].mxu0 %v619
        %v1025 = vpop.f32.mrb[0].mxu0
        %v1026 = vadd.f32 %v373, %v1025
        %v1027 = vpop.f32.mrb[0].mxu0
        %v1028 = vpop.f32.mrb[0].mxu0
        %v1029 = vadd.f32 %v373, %v1028
        %v1030 = vpop.f32.mrb[0].mxu0
        %1031 = vmatprep.mubr.bf16.mxu0 %v624
        %1032 = vmatmul.mubr.bf16.gmra.mrb[0].mxu0 %v623
        %v1033 = vpop.f32.mrb[0].mxu0
        %v1034 = vadd.f32 %v373, %v1033
        %v1035 = vpop.f32.mrb[0].mxu0
        %v1036 = vpop.f32.mrb[0].mxu0
        %v1037 = vadd.f32 %v373, %v1036
        %v1038 = vpop.f32.mrb[0].mxu0
        %1039 = vmatprep.mubr.bf16.mxu0 %v628
        %1040 = vmatmul.mubr.bf16.gmra.mrb[0].mxu0 %v627
        %v1041 = vpop.f32.mrb[0].mxu0
        %v1042 = vadd.f32 %v373, %v1041
        %v1043 = vpop.f32.mrb[0].mxu0
        %v1044 = vpop.f32.mrb[0].mxu0
        %v1045 = vadd.f32 %v373, %v1044
        %v1046 = vpop.f32.mrb[0].mxu0
        %1047 = vdwg.mxu0
        %1048 = vmatprep.subr.bf16.mxu0 0
        %1049 = vmatpush1.bf16.msra.mxu0 %v839
        %1050 = vmatprep.subr.bf16.mxu0 0
        %1051 = vmatpush1.bf16.msra.mxu0 %v840
        %1052 = vmatprep.subr.bf16.mxu0 0
        %1053 = vmatpush1.bf16.msra.mxu0 %v841
        %1054 = vmatprep.subr.bf16.mxu0 0
        %1055 = vmatpush1.bf16.msra.mxu0 %v842
        %1056 = vmatprep.subr.bf16.mxu0 0
        %1057 = vmatpush1.bf16.msra.mxu0 %v843
        %1058 = vmatprep.subr.bf16.mxu0 0
        %1059 = vmatpush1.bf16.msra.mxu0 %v844
        %1060 = vmatprep.subr.bf16.mxu0 0
        %1061 = vmatpush1.bf16.msra.mxu0 %v845
        %1062 = vmatprep.subr.bf16.mxu0 0
        %1063 = vmatpush1.bf16.msra.mxu0 %v846
        %1064 = vmatprep.subr.bf16.mxu0 0
        %1065 = vmatpush1.bf16.msra.mxu0 %v847
        %1066 = vmatprep.subr.bf16.mxu0 0
        %1067 = vmatpush1.bf16.msra.mxu0 %v848
        %1068 = vmatprep.subr.bf16.mxu0 0
        %1069 = vmatpush1.bf16.msra.mxu0 %v849
        %1070 = vmatprep.subr.bf16.mxu0 0
        %1071 = vmatpush1.bf16.msra.mxu0 %v850
        %1072 = vmatprep.subr.bf16.mxu0 0
        %1073 = vmatpush1.bf16.msra.mxu0 %v851
        %1074 = vmatprep.subr.bf16.mxu0 0
        %1075 = vmatpush1.bf16.msra.mxu0 %v852
        %1076 = vmatprep.subr.bf16.mxu0 0
        %1077 = vmatpush1.bf16.msra.mxu0 %v853
        %1078 = vmatprep.subr.bf16.mxu0 0
        %1079 = vmatpush1.bf16.msra.mxu0 %v854
        %1080 = vmatprep.mubr.bf16.mxu0 %v570
        %1081 = vmatmul.mubr.bf16.gmra.mrb[0].mxu0 %v569
        %v1082 = vpop.f32.mrb[0].mxu0
        %v1083 = vadd.f32 %v922, %v1082
        %v1084 = vpop.f32.mrb[0].mxu0
        %v1085 = vpop.f32.mrb[0].mxu0
        %v1086 = vadd.f32 %v925, %v1085
        %v1087 = vpop.f32.mrb[0].mxu0
        %1088 = vmatprep.mubr.bf16.mxu0 %v574
        %1089 = vmatmul.mubr.bf16.gmra.mrb[0].mxu0 %v573
        %v1090 = vpop.f32.mrb[0].mxu0
        %v1091 = vadd.f32 %v930, %v1090
        %v1092 = vpop.f32.mrb[0].mxu0
        %v1093 = vpop.f32.mrb[0].mxu0
        %v1094 = vadd.f32 %v933, %v1093
        %v1095 = vpop.f32.mrb[0].mxu0
        %1096 = vmatprep.mubr.bf16.mxu0 %v578
        %1097 = vmatmul.mubr.bf16.gmra.mrb[0].mxu0 %v577
        %v1098 = vpop.f32.mrb[0].mxu0
        %v1099 = vadd.f32 %v938, %v1098
        %v1100 = vpop.f32.mrb[0].mxu0
        %v1101 = vpop.f32.mrb[0].mxu0
        %v1102 = vadd.f32 %v941, %v1101
        %v1103 = vpop.f32.mrb[0].mxu0
        %1104 = vmatprep.mubr.bf16.mxu0 %v582
        %1105 = vmatmul.mubr.bf16.gmra.mrb[0].mxu0 %v581
        %v1106 = vpop.f32.mrb[0].mxu0
        %v1107 = vadd.f32 %v946, %v1106
        %v1108 = vpop.f32.mrb[0].mxu0
        %v1109 = vpop.f32.mrb[0].mxu0
        %v1110 = vadd.f32 %v949, %v1109
        %v1111 = vpop.f32.mrb[0].mxu0
        %1112 = vmatprep.mubr.bf16.mxu0 %v586
        %1113 = vmatmul.mubr.bf16.gmra.mrb[0].mxu0 %v585
        %v1114 = vpop.f32.mrb[0].mxu0
        %v1115 = vadd.f32 %v954, %v1114
        %v1116 = vpop.f32.mrb[0].mxu0
        %v1117 = vpop.f32.mrb[0].mxu0
        %v1118 = vadd.f32 %v957, %v1117
        %v1119 = vpop.f32.mrb[0].mxu0
        %1120 = vmatprep.mubr.bf16.mxu0 %v590
        %1121 = vmatmul.mubr.bf16.gmra.mrb[0].mxu0 %v589
        %v1122 = vpop.f32.mrb[0].mxu0
        %v1123 = vadd.f32 %v962, %v1122
        %v1124 = vpop.f32.mrb[0].mxu0
        %v1125 = vpop.f32.mrb[0].mxu0
        %v1126 = vadd.f32 %v965, %v1125
        %v1127 = vpop.f32.mrb[0].mxu0
        %1128 = vmatprep.mubr.bf16.mxu0 %v594
        %1129 = vmatmul.mubr.bf16.gmra.mrb[0].mxu0 %v593
        %v1130 = vpop.f32.mrb[0].mxu0
        %v1131 = vadd.f32 %v970, %v1130
        %v1132 = vpop.f32.mrb[0].mxu0
        %v1133 = vpop.f32.mrb[0].mxu0
        %v1134 = vadd.f32 %v973, %v1133
        %v1135 = vpop.f32.mrb[0].mxu0
        %1136 = vmatprep.mubr.bf16.mxu0 %v598
        %1137 = vmatmul.mubr.bf16.gmra.mrb[0].mxu0 %v597
        %v1138 = vpop.f32.mrb[0].mxu0
        %v1139 = vadd.f32 %v978, %v1138
        %v1140 = vpop.f32.mrb[0].mxu0
        %v1141 = vpop.f32.mrb[0].mxu0
        %v1142 = vadd.f32 %v981, %v1141
        %v1143 = vpop.f32.mrb[0].mxu0
        %1144 = vmatprep.mubr.bf16.mxu0 %v602
        %1145 = vmatmul.mubr.bf16.gmra.mrb[0].mxu0 %v601
        %v1146 = vpop.f32.mrb[0].mxu0
        %v1147 = vadd.f32 %v986, %v1146
        %v1148 = vpop.f32.mrb[0].mxu0
        %v1149 = vpop.f32.mrb[0].mxu0
        %v1150 = vadd.f32 %v989, %v1149
        %v1151 = vpop.f32.mrb[0].mxu0
        %1152 = vmatprep.mubr.bf16.mxu0 %v606
        %1153 = vmatmul.mubr.bf16.gmra.mrb[0].mxu0 %v605
        %v1154 = vpop.f32.mrb[0].mxu0
        %v1155 = vadd.f32 %v994, %v1154
        %v1156 = vpop.f32.mrb[0].mxu0
        %v1157 = vpop.f32.mrb[0].mxu0
        %v1158 = vadd.f32 %v997, %v1157
        %v1159 = vpop.f32.mrb[0].mxu0
        %1160 = vmatprep.mubr.bf16.mxu0 %v610
        %1161 = vmatmul.mubr.bf16.gmra.mrb[0].mxu0 %v609
        %v1162 = vpop.f32.mrb[0].mxu0
        %v1163 = vadd.f32 %v1002, %v1162
        %v1164 = vpop.f32.mrb[0].mxu0
        %v1165 = vpop.f32.mrb[0].mxu0
        %v1166 = vadd.f32 %v1005, %v1165
        %v1167 = vpop.f32.mrb[0].mxu0
        %1168 = vmatprep.mubr.bf16.mxu0 %v614
        %1169 = vmatmul.mubr.bf16.gmra.mrb[0].mxu0 %v613
        %v1170 = vpop.f32.mrb[0].mxu0
        %v1171 = vadd.f32 %v1010, %v1170
        %v1172 = vpop.f32.mrb[0].mxu0
        %v1173 = vpop.f32.mrb[0].mxu0
        %v1174 = vadd.f32 %v1013, %v1173
        %v1175 = vpop.f32.mrb[0].mxu0
        %1176 = vmatprep.mubr.bf16.mxu0 %v618
        %1177 = vmatmul.mubr.bf16.gmra.mrb[0].mxu0 %v617
        %v1178 = vpop.f32.mrb[0].mxu0
        %v1179 = vadd.f32 %v1018, %v1178
        %v1180 = vpop.f32.mrb[0].mxu0
        %v1181 = vpop.f32.mrb[0].mxu0
        %v1182 = vadd.f32 %v1021, %v1181
        %v1183 = vpop.f32.mrb[0].mxu0
        %1184 = vmatprep.mubr.bf16.mxu0 %v622
        %1185 = vmatmul.mubr.bf16.gmra.mrb[0].mxu0 %v621
        %v1186 = vpop.f32.mrb[0].mxu0
        %v1187 = vadd.f32 %v1026, %v1186
        %v1188 = vpop.f32.mrb[0].mxu0
        %v1189 = vpop.f32.mrb[0].mxu0
        %v1190 = vadd.f32 %v1029, %v1189
        %v1191 = vpop.f32.mrb[0].mxu0
        %1192 = vmatprep.mubr.bf16.mxu0 %v626
        %1193 = vmatmul.mubr.bf16.gmra.mrb[0].mxu0 %v625
        %v1194 = vpop.f32.mrb[0].mxu0
        %v1195 = vadd.f32 %v1034, %v1194
        %v1196 = vpop.f32.mrb[0].mxu0
        %v1197 = vpop.f32.mrb[0].mxu0
        %v1198 = vadd.f32 %v1037, %v1197
        %v1199 = vpop.f32.mrb[0].mxu0
        %1200 = vmatprep.mubr.bf16.mxu0 %v630
        %1201 = vmatmul.mubr.bf16.gmra.mrb[0].mxu0 %v629
        %v1202 = vpop.f32.mrb[0].mxu0
        %v1203 = vadd.f32 %v1042, %v1202
        %v1204 = vpop.f32.mrb[0].mxu0
        %v1205 = vpop.f32.mrb[0].mxu0
        %v1206 = vadd.f32 %v1045, %v1205
        %v1207 = vpop.f32.mrb[0].mxu0
        %1208 = vdwg.mxu0
        %v1209 = vmax.f32 %v1083, 0.0
        %v1210 = vmax.f32 %v1086, 0.0
        %v1211 = vmax.f32 %v1091, 0.0
        %v1212 = vmax.f32 %v1094, 0.0
        %v1213 = vmax.f32 %v1099, 0.0
        %v1214 = vmax.f32 %v1102, 0.0
        %v1215 = vmax.f32 %v1107, 0.0
        %v1216 = vmax.f32 %v1110, 0.0
        %v1217 = vmax.f32 %v1115, 0.0
        %v1218 = vmax.f32 %v1118, 0.0
        %v1219 = vmax.f32 %v1123, 0.0
        %v1220 = vmax.f32 %v1126, 0.0
        %v1221 = vmax.f32 %v1131, 0.0
        %v1222 = vmax.f32 %v1134, 0.0
        %v1223 = vmax.f32 %v1139, 0.0
        %v1224 = vmax.f32 %v1142, 0.0
        %v1225 = vmax.f32 %v1147, 0.0
        %v1226 = vmax.f32 %v1150, 0.0
        %v1227 = vmax.f32 %v1155, 0.0
        %v1228 = vmax.f32 %v1158, 0.0
        %v1229 = vmax.f32 %v1163, 0.0
        %v1230 = vmax.f32 %v1166, 0.0
        %v1231 = vmax.f32 %v1171, 0.0
        %v1232 = vmax.f32 %v1174, 0.0
        %v1233 = vmax.f32 %v1179, 0.0
        %v1234 = vmax.f32 %v1182, 0.0
        %v1235 = vmax.f32 %v1187, 0.0
        %v1236 = vmax.f32 %v1190, 0.0
        %v1237 = vmax.f32 %v1195, 0.0
        %v1238 = vmax.f32 %v1198, 0.0
        %v1239 = vmax.f32 %v1203, 0.0
        %v1240 = vmax.f32 %v1206, 0.0
        %s1241 = sadd.s32 %s22, %s23
        %s1242 = smul.u32 %s1241, 256
        %v1243 = vlaneseq
        %v1244 = vand.u32 %v1243, 127
        %v1245 = vadd.s32 %v1244, 128
        %v1246 = vstv %s1242
        %v1247 = vadd.s32 %v1246, %v1244
        %v1248 = vadd.s32 %v1246, %v1245
        %v1249 = vld [vmem:[%s3] sm:$0xff]
        %1250 = vset.pattern.permute.xlu0 0
        %1251 = vperm.xlu0 %1250, %v1249
        %v1252 = vpop.permute.xlu0 %1251
        %vm1253 = vcmp.ge.s32.totalorder %v1247, %v1252
        %vm1254 = vcmp.ge.s32.totalorder %v1248, %v1252
        %1255 = vset.pattern.permute.xlu0 1
        %1256 = vperm.xlu0 %1255, %v1249
        %v1257 = vpop.permute.xlu0 %1256
        %vm1258 = vcmp.lt.s32.totalorder %v1247, %v1257
        %vm1259 = vcmp.lt.s32.totalorder %v1248, %v1257
        %vm1260 = vmand %vm1253, %vm1258
        %vm1261 = vmand %vm1254, %vm1259
        %v1262 = vsel %vm1260, 1, 0
        %v1263 = vsel %vm1261, 1, 0
        %v1264 = vcvt.s32.f32 %v1262
        %v1265 = vcvt.s32.f32 %v1263
        %v1266 = vld [vmem:[%s233] sm:$0xff]
        %1267 = vmatprep.subr.mxu0 0.0
        %1268 = vmatpush1.msra.mxu0 %v1209
        %1269 = vmatprep.subr.mxu0 0.0
        %1270 = vmatpush1.msra.mxu0 %v1210
        %1271 = vmatprep.subr.mxu0 0.0
        %1272 = vmatpush1.msra.mxu0 %v1211
        %1273 = vmatprep.subr.mxu0 0.0
        %1274 = vmatpush1.msra.mxu0 %v1212
        %1275 = vmatprep.subr.mxu0 0.0
        %1276 = vmatpush1.msra.mxu0 %v1213
        %1277 = vmatprep.subr.mxu0 0.0
        %1278 = vmatpush1.msra.mxu0 %v1214
        %1279 = vmatprep.subr.mxu0 0.0
        %1280 = vmatpush1.msra.mxu0 %v1215
        %1281 = vmatprep.subr.mxu0 0.0
        %1282 = vmatpush1.msra.mxu0 %v1216
        %1283 = vmatprep.subr.mxu0 0.0
        %1284 = vmatpush1.msra.mxu0 %v1217
        %1285 = vmatprep.subr.mxu0 0.0
        %1286 = vmatpush1.msra.mxu0 %v1218
        %1287 = vmatprep.subr.mxu0 0.0
        %1288 = vmatpush1.msra.mxu0 %v1219
        %1289 = vmatprep.subr.mxu0 0.0
        %1290 = vmatpush1.msra.mxu0 %v1220
        %1291 = vmatprep.subr.mxu0 0.0
        %1292 = vmatpush1.msra.mxu0 %v1221
        %1293 = vmatprep.subr.mxu0 0.0
        %1294 = vmatpush1.msra.mxu0 %v1222
        %1295 = vmatprep.subr.mxu0 0.0
        %1296 = vmatpush1.msra.mxu0 %v1223
        %1297 = vmatprep.subr.mxu0 0.0
        %1298 = vmatpush1.msra.mxu0 %v1224
        %1299 = vmatprep.subr.mxu0 0.0
        %1300 = vmatpush1.msra.mxu0 %v1225
        %1301 = vmatprep.subr.mxu0 0.0
        %1302 = vmatpush1.msra.mxu0 %v1226
        %1303 = vmatprep.subr.mxu0 0.0
        %1304 = vmatpush1.msra.mxu0 %v1227
        %1305 = vmatprep.subr.mxu0 0.0
        %1306 = vmatpush1.msra.mxu0 %v1228
        %1307 = vmatprep.subr.mxu0 0.0
        %1308 = vmatpush1.msra.mxu0 %v1229
        %1309 = vmatprep.subr.mxu0 0.0
        %1310 = vmatpush1.msra.mxu0 %v1230
        %1311 = vmatprep.subr.mxu0 0.0
        %1312 = vmatpush1.msra.mxu0 %v1231
        %1313 = vmatprep.subr.mxu0 0.0
        %1314 = vmatpush1.msra.mxu0 %v1232
        %1315 = vmatprep.subr.mxu0 0.0
        %1316 = vmatpush1.msra.mxu0 %v1233
        %1317 = vmatprep.subr.mxu0 0.0
        %1318 = vmatpush1.msra.mxu0 %v1234
        %1319 = vmatprep.subr.mxu0 0.0
        %1320 = vmatpush1.msra.mxu0 %v1235
        %1321 = vmatprep.subr.mxu0 0.0
        %1322 = vmatpush1.msra.mxu0 %v1236
        %1323 = vmatprep.subr.mxu0 0.0
        %1324 = vmatpush1.msra.mxu0 %v1237
        %1325 = vmatprep.subr.mxu0 0.0
        %1326 = vmatpush1.msra.mxu0 %v1238
        %1327 = vmatprep.subr.mxu0 0.0
        %1328 = vmatpush1.msra.mxu0 %v1239
        %1329 = vmatprep.subr.mxu0 0.0
        %1330 = vmatpush1.msra.mxu0 %v1240
        %1331 = vmatprep.mubr.f32.mxu0 %v1265
        %1332 = vmatmul.mubr.f32.gmra.mrb[0].mxu0 %v1264
        %v1333 = vpop.f32.mrb[0].mxu0
        %v1334 = vadd.f32 0.0, %v1333
        %v1335 = vpop.f32.mrb[0].mxu0
        %1336 = vdwg.mxu0
        %v1337 = vadd.f32 %v1266, %v1334
        %1338 = vst [vmem:[%s233] sm:$0xff] %v1337
        %p1339 = scmp.lt.s32.totalorder %s22, 1
        %s1340 = scalar_select %p1339, %s22, 1
        %s1341 = smul.addr %s1340, 8
        %s1342 = scalar_lea.vmem %s4, %s1341
        // Predicated region
        $region45: #{gnn_classifier_forward.1} parent=35 // pred_check
          %p1343 = pneg %p139
        $region46: #{gnn_classifier_forward.1} parent=35 // pred_check_branch
          %1345 = sbr.rel (%p1343) target = $region48
        $region47: #{gnn_classifier_forward.1} parent=35 // pred_region
          _
        $region48: #{gnn_classifier_forward.1} parent=35 // pred_fallthru
          _
      $region36: #{gnn_classifier_forward.1} parent=5 // pred_fallthru
        _
      %p1346 = scmp.le.s32.totalorder 2, %s13
      // Predicated region
      $region49: #{gnn_classifier_forward.1} parent=5 // pred_check
        %p1347 = pneg %p1346
      $region50: #{gnn_classifier_forward.1} parent=5 // pred_check_branch
        %1349 = sbr.rel (%p1347) target = $region52
      $region51: #{gnn_classifier_forward.1} parent=5 // pred_region
        %s1350 = ssub.s32 %s13, 2
        // Predicated region
        $region53: #{gnn_classifier_forward.1} parent=51 // pred_check
          %p1351 = pneg %p145
        $region54: #{gnn_classifier_forward.1} parent=51 // pred_check_branch
          %1353 = sbr.rel (%p1351) target = $region56
        $region55: #{gnn_classifier_forward.1} parent=51 // pred_region
          %p1354 = scmp.lt.s32.totalorder %s24, 1
          %s1355 = scalar_select %p1354, %s24, 1
          %s1356 = smul.addr %s1355, 8
          %s1357 = scalar_lea.vmem %s4, %s1356
        $region56: #{gnn_classifier_forward.1} parent=51 // pred_fallthru
          _
      $region52: #{gnn_classifier_forward.1} parent=5 // pred_fallthru
        _
    $region6: #{gnn_classifier_forward.1} parent=1 // loop_footer
      %s17 = sadd.s32 1, %s13
    $region7: #{gnn_classifier_forward.1} parent=1 // loop_footer_branch
      %12 = sbr.rel target = $region3
    $region8: #{gnn_classifier_forward.1} parent=1 // loop_exit
      _
    %1358 = vsyncpa [#allocation3], 1
    %s1359 = scalar_lea.sflag [#allocation3], 1
    %1360 = vsyncpa %s1359, 1

</llo_original>
